<compile_context>
chip_gen: v7x
topology: tpu7x:2x2x1
jax: 0.10.0
libtpu: 0.0.40
codegen_flags: <defaults>
</compile_context>

<pallas_src>
import math

import jax
import jax.numpy as jnp
from jax.experimental import pallas as pl
from jax.experimental.pallas import tpu as pltpu


def _identity_copy_kernel(x_ref, o_ref):
    # With input_output_aliases={0: 0} the output block aliases the input
    # block, so this write degenerates to an in-place no-op.
    o_ref[...] = x_ref[...]


def _round_up(x: int, m: int) -> int:
    return ((x + m - 1) // m) * m


def simple_voxel_forward(ret: dict) -> jax.Array:
    """Pallas equivalent of SimpleVoxel.forward: returns ret['voxels'] unchanged.

    NOTE: in a real pipeline, prefer `return ret['voxels']` directly — the op
    is an identity and needs no kernel at all.  The pallas_call below exists
    only to demonstrate the fused/aliased form.
    """
    voxels = ret["voxels"]  # (N, T, C) in the module's native layout
    orig_shape = voxels.shape
    dtype = voxels.dtype
    total = math.prod(orig_shape)
    itemsize = jnp.dtype(dtype).itemsize

    # --- lane-dense 2D layout -------------------------------------------------
    # Present the contiguous data as (rows, lane) with `lane` a wide multiple of
    # 128; a trailing dim of C=4 would leave the store slot 4/128 masked.
    lane = 1024 if total >= 1024 else 128
    rows = pl.cdiv(total, lane)

    # --- block sizing ---------------------------------------------------------
    # ~4 MiB blocks: large enough to sit near the HBM roofline (>=85% measured
    # at 512+ tiles on v6e), small enough that in+out double buffering
    # (~4x block = 16 MiB) fits v7x's 64 MiB VMEM and the raised v5e limit.
    target_block_bytes = 4 * 1024 * 1024
    block_rows = max(1, target_block_bytes // (lane * itemsize))
    block_rows = min(block_rows, rows)
    if block_rows >= 8:
        block_rows = (block_rows // 8) * 8  # keep second-minor dim 8-aligned

    padded_rows = _round_up(rows, block_rows)
    padded_total = padded_rows * lane

    flat = jnp.ravel(voxels)
    if padded_total != total:
        # Real voxelized point clouds have arbitrary N; pad to the tile instead
        # of asserting divisibility, then slice the result back.
        flat = jnp.pad(flat, (0, padded_total - total))
    slab = flat.reshape(padded_rows, lane)

    grid = (padded_rows // block_rows,)

    out_slab = pl.pallas_call(
        _identity_copy_kernel,
        out_shape=jax.ShapeDtypeStruct((padded_rows, lane), dtype),
        grid=grid,
        in_specs=[pl.BlockSpec((block_rows, lane), lambda i: (i, 0))],
        out_specs=pl.BlockSpec((block_rows, lane), lambda i: (i, 0)),
        # Output aliases the input: the copy collapses to a no-op on one buffer.
        input_output_aliases={0: 0},
        compiler_params=pltpu.CompilerParams(
            # Parallel grid axis: Mosaic may shard it across v7x's 2 TCs.
            dimension_semantics=("parallel",),
            # Lift v5e's 16 MiB default scoped-VMEM limit so double-buffered
            # 4 MiB blocks stay fully pipelined; harmless on v6e/v7x.
            vmem_limit_bytes=32 * 1024 * 1024,
        ),
    )(slab)

    out_flat = out_slab.reshape(padded_total)
    if padded_total != total:
        out_flat = out_flat[:total]
    return out_flat.reshape(orig_shape)


if __name__ == "__main__":
    key = jax.random.PRNGKey(0)

    # Small, module-consistent shapes: 16 voxels, 8 points/voxel,
    # num_input_features=4 (x, y, z, reflectance).
    num_voxels, max_points, num_features = 16, 8, 4
    voxels = jax.random.normal(
        key, (num_voxels, max_points, num_features), dtype=jnp.float32
    )
    out = simple_voxel_forward({"voxels": voxels})
    out = jax.block_until_ready(out)
    assert out.shape == voxels.shape and out.dtype == voxels.dtype
    assert bool(jnp.array_equal(out, voxels))

    # Ragged voxel count (not divisible by the tile) exercises the pad/slice path.
    key2 = jax.random.PRNGKey(1)
    voxels_ragged = jax.random.normal(key2, (13, 8, 4), dtype=jnp.float32)
    out2 = jax.block_until_ready(simple_voxel_forward({"voxels": voxels_ragged}))
    assert out2.shape == voxels_ragged.shape
    assert bool(jnp.array_equal(out2, voxels_ragged))

    print("KERNEL_OK")
</pallas_src>

<mosaic_0001>
module attributes {stable_mosaic.version = 11 : i64} {
  func.func @_identity_copy_kernel(%arg0: i32, %arg1: memref<4x128xf32, #tpu.memory_space<vmem>>, %arg2: memref<4x128xf32, #tpu.memory_space<vmem>>) attributes {dimension_semantics = [#tpu.dimension_semantics<parallel>], iteration_bounds = array<i64: 1>, scalar_prefetch = 0 : i64, scratch_operands = 0 : i64, tpu.core_type = #tpu.core_type<tc>, window_params = [{transform_indices = @transform_0, window_bounds = array<i64: 4, 128>}, {transform_indices = @transform_1, window_bounds = array<i64: 4, 128>}]} {
    %c0 = arith.constant 0 : index
    %c0_0 = arith.constant 0 : index
    %0 = vector.load %arg1[%c0, %c0_0] : memref<4x128xf32, #tpu.memory_space<vmem>>, vector<4x128xf32>
    %c0_1 = arith.constant 0 : index
    %c0_2 = arith.constant 0 : index
    %1 = vector.load %arg2[%c0_1, %c0_2] : memref<4x128xf32, #tpu.memory_space<vmem>>, vector<4x128xf32>
    tpu.vector_store %arg2[%c0_1, %c0_2], %0 {strides = array<i32>} : memref<4x128xf32, #tpu.memory_space<vmem>>, vector<4x128xf32>,
    return
  }
  func.func @transform_0(%arg0: i32) -> (i32, i32) {
    %c0_i32 = arith.constant 0 : i32
    %c0_i32_0 = arith.constant 0 : i32
    return %arg0, %c0_i32 : i32, i32
  }
  func.func @transform_1(%arg0: i32) -> (i32, i32) {
    %c0_i32 = arith.constant 0 : i32
    %c0_i32_0 = arith.constant 0 : i32
    return %arg0, %c0_i32 : i32, i32
  }
}

</mosaic_0001>

<llo_original>
// kernel: tpu_custom_call.1
$region0: #{tpu_custom_call.1}
  #allocation0 [shape = 'u32[]', space=smem, size = 0x4, offset = 0x4, fixed_abs, tag = 'smem constant byte address 0x4 - core index']
  #allocation1 [shape = 'u32[144,128]{1,0:T(1,128)}', space=vmem, size = 0x12000, scoped, tag = 'internal scratch']
  %s0 = inlined_call_operand.hbm [shape: f32[4,128], index: 0, kind: input, shape index: {}, may-alias: {0,1}]
  %s1 = inlined_call_operand.hbm [shape: f32[4,128], index: 1, kind: output, shape index: {}, may-alias: {0,1}]
  %s2 = sld [smem:[#allocation0]]
  $region18: #{tpu_custom_call.1} parent=0
    _
  %s4 = ssub.s32 1, %s2
  %s5 = scalar_select 0, %s4, %s2
  $region1: #{tpu_custom_call.1} parent=0
    #allocation2 [shape = 'u8[2048]{0}', space=vmem, size = 0x800, scoped, tag = 'input window, operand 0, single buffered']
    #allocation3 [shape = 's32[1]{0}', space=sflag, size = 0x4, scoped, tag = 'scoped memory for tpu_custom_call.1']
    #allocation4 [shape = 's32[1]{0}', space=sflag, size = 0x4, scoped, tag = 'scoped memory for tpu_custom_call.1']
    #allocation5 [shape = 'u8[2048]{0}', space=vmem, size = 0x800, scoped, tag = 'output window, operand 0, single buffered']
    %6 = vsyncpa [#allocation3], 0
    %7 = vsyncpa [#allocation4], 0
    // Predicated region
    $region2: #{tpu_custom_call.1} parent=1 // pred_check
      _
    $region3: #{tpu_custom_call.1} parent=1 // pred_check_branch
      %9 = sbr.rel (0) target = $region5
    $region4: #{tpu_custom_call.1} parent=1 // pred_region
      %s11 = ssub.s32 64, 64
      %12 = vsyncadd [#allocation3], %s11
      %s14 = sshll.u32 [#allocation2], 4
      %s15 = int_to_ptr.vmem [resolvable:$true] %s14
      %17 = dma.hbm_to_vmem [thread:$0]  %s0, 64, %s15, [#allocation3]
    $region5: #{tpu_custom_call.1} parent=1 // pred_fallthru
      _
    // Predicated region
    $region6: #{tpu_custom_call.1} parent=1 // pred_check
      _
    $region7: #{tpu_custom_call.1} parent=1 // pred_check_branch
      %19 = sbr.rel (0) target = $region9
    $region8: #{tpu_custom_call.1} parent=1 // pred_region
      %20 = dma.done [#allocation3], 64
    $region9: #{tpu_custom_call.1} parent=1 // pred_fallthru
      _
    %v21 = vld [vmem:[#allocation2] sm:$0xf]
    %22 = vst [vmem:[#allocation5] sm:$0xf] %v21
    // Predicated region
    $region10: #{tpu_custom_call.1} parent=1 // pred_check
      _
    $region11: #{tpu_custom_call.1} parent=1 // pred_check_branch
      %24 = sbr.rel (0) target = $region13
    $region12: #{tpu_custom_call.1} parent=1 // pred_region
      %s26 = ssub.s32 64, 64
      %27 = vsyncadd [#allocation4], %s26
      %s29 = sshll.u32 [#allocation5], 4
      %s30 = int_to_ptr.vmem [resolvable:$true] %s29
      %32 = dma.vmem_to_hbm [thread:$0]  %s30, 64, %s1, [#allocation4]
    $region13: #{tpu_custom_call.1} parent=1 // pred_fallthru
      _
    // Predicated region
    $region14: #{tpu_custom_call.1} parent=1 // pred_check
      _
    $region15: #{tpu_custom_call.1} parent=1 // pred_check_branch
      %34 = sbr.rel (0) target = $region17
    $region16: #{tpu_custom_call.1} parent=1 // pred_region
      %35 = dma.done [#allocation4], 64
    $region17: #{tpu_custom_call.1} parent=1 // pred_fallthru
      _
    %36 = vsyncpa [#allocation3], 1
    %37 = vsyncpa [#allocation4], 1

</llo_original>
